<compile_context>
chip_gen: v5e
topology: v5e:2x2
jax: 0.10.0
libtpu: 0.0.40
codegen_flags: <defaults>
</compile_context>

<pallas_src>
import functools

import jax
import jax.numpy as jnp
from jax.experimental import pallas as pl
from jax.experimental.pallas import tpu as pltpu

LANE = 128      # lane width (last-dim tiling)
SUBLANE = 8     # f32 sublane count (second-to-last-dim tiling)


def _round_up(x, m):
    return ((x + m - 1) // m) * m


# ----------------------------------------------------------------------------
# Kernel
# ----------------------------------------------------------------------------
def make_mlp_kernel(num_linear):
    """Fuses `num_linear` Linear layers; ReLU after every layer but the last.

    Kernel args: x_ref, (w_ref, b_ref) * num_linear, o_ref.
    Weights are bf16 (padded to 128-lane output dims); biases are f32.
    Matmuls accumulate in f32 on the MXU; bias/ReLU stay in f32.
    """

    def kernel(*refs):
        x_ref = refs[0]
        o_ref = refs[-1]
        wb_refs = refs[1:-1]
        h = x_ref[...].astype(jnp.bfloat16)          # (tile_b, state_space)
        for i in range(num_linear):
            w = wb_refs[2 * i][...]                  # bf16 (K_i, N_i_padded)
            b = wb_refs[2 * i + 1][...]              # f32  (1,   N_i_padded)
            acc = jnp.dot(h, w, preferred_element_type=jnp.float32) + b
            if i < num_linear - 1:                   # ReLU on hidden layers only
                acc = jnp.maximum(acc, 0.0)
                h = acc.astype(jnp.bfloat16)         # bf16 operand for next MXU pass
            else:
                h = acc                              # final layer stays f32
        o_ref[...] = h                               # lane-dense (tile_b, 128) store

    return kernel


# ----------------------------------------------------------------------------
# One-time parameter preparation (hoisted out of the per-call path)
# ----------------------------------------------------------------------------
def pad_dense_network_params(params):
    """Pad every layer's OUTPUT dim to a multiple of 128 lanes and cast weights
    to bf16.  Layer 0's contraction dim (state_space) is left unpadded so x
    needs no lane padding in HBM.  Padding is an exact no-op on real outputs
    (zero K rows / zero output columns / ReLU(0)=0)."""
    padded = []
    for i, (w, b) in enumerate(params):
        k, n = w.shape
        k_pad = k if i == 0 else _round_up(k, LANE)   # matches prev layer's padded N
        n_pad = _round_up(n, LANE)
        w_p = jnp.pad(w, ((0, k_pad - k), (0, n_pad - n))).astype(jnp.bfloat16)
        b_p = jnp.pad(b, ((0, 0), (0, n_pad - n)))    # f32
        padded.append((w_p, b_p))
    return tuple(padded)


# ----------------------------------------------------------------------------
# Forward pass
# ----------------------------------------------------------------------------
@functools.partial(jax.jit, static_argnames=("tile_b", "action_space"))
def _forward_padded(x, padded_params, tile_b, action_space):
    batch, state_space = x.shape
    num_linear = len(padded_params)

    # Only the batch dim is padded; the feature dim stays state_space.
    pbatch = _round_up(batch, tile_b)
    x_p = jnp.pad(x, ((0, pbatch - batch), (0, 0)))

    # Activations tiled over the batch grid; weights/biases are full-array
    # blocks with constant index_map -> fetched once, VMEM-resident.
    flat_inputs = [x_p]
    in_specs = [pl.BlockSpec((tile_b, state_space), lambda i: (i, 0))]
    for w_p, b_p in padded_params:
        flat_inputs.append(w_p)
        flat_inputs.append(b_p)
        in_specs.append(pl.BlockSpec(w_p.shape, lambda i: (0, 0)))
        in_specs.append(pl.BlockSpec(b_p.shape, lambda i: (0, 0)))

    out_pad = padded_params[-1][0].shape[1]
    out_p = pl.pallas_call(
        make_mlp_kernel(num_linear),
        out_shape=jax.ShapeDtypeStruct((pbatch, out_pad), jnp.float32),
        grid=(pbatch // tile_b,),
        in_specs=in_specs,
        out_specs=pl.BlockSpec((tile_b, out_pad), lambda i: (i, 0)),
        compiler_params=pltpu.CompilerParams(
            dimension_semantics=("parallel",),        # v7x: split batch over 2 TCs
            vmem_limit_bytes=32 * 1024 * 1024),       # portable to v7x's 64 MiB VMEM
    )(*flat_inputs)

    # Strip batch padding and the lane padding of the small action output.
    # Inside the jit this is a tiny fused slice, not an eager full-array pass.
    return out_p[:batch, :action_space]


def _default_tile_b(batch):
    pb = _round_up(batch, SUBLANE)
    if pb < 256:
        return pb                                     # tiny batch: single grid step
    # Large batches: 512-1024 row tiles for DMA efficiency, but always keep
    # >= 2 grid steps so v7x's two TensorCores both get work.
    half = _round_up(pl.cdiv(pb, 2), SUBLANE)
    return min(1024 if pb >= 4096 else 512, half)


def dense_network_forward(x, padded_params, action_space, *, tile_b=None):
    """Forward pass of DenseNetwork.  `padded_params` must come from
    pad_dense_network_params (called once at init, not per step)."""
    if tile_b is None:
        tile_b = _default_tile_b(x.shape[0])
    return _forward_padded(x, padded_params, tile_b, action_space)


# ----------------------------------------------------------------------------
# Parameter init (mimics PyTorch nn.Linear default init)
# ----------------------------------------------------------------------------
def init_linear_params(key, fan_in, fan_out):
    kw, kb = jax.random.split(key)
    bound = 1.0 / jnp.sqrt(jnp.float32(fan_in))
    # weight stored already transposed: (in, out), so forward is x @ W + b
    w_t = jax.random.uniform(kw, (fan_in, fan_out), jnp.float32, -bound, bound)
    b = jax.random.uniform(kb, (1, fan_out), jnp.float32, -bound, bound)
    return w_t, b


def build_dense_network_params(key, state_space, action_space, layers):
    """Shapes mirror DenseNetwork.__init__: input, (l1), (l2), output."""
    dims = [state_space] + list(layers) + [action_space]
    params = []
    for i in range(len(dims) - 1):
        key, sub = jax.random.split(key)
        params.append(init_linear_params(sub, dims[i], dims[i + 1]))
    return params


# ----------------------------------------------------------------------------
# Pure-JAX references for correctness
# ----------------------------------------------------------------------------
def ref_forward_f32(x, params):
    h = x
    for i, (w, b) in enumerate(params):
        h = h @ w + b
        if i < len(params) - 1:
            h = jnp.maximum(h, 0.0)
    return h


def ref_forward_bf16(x, params):
    # Same bf16-matmul / f32-accumulate recipe as the kernel.
    h = x
    for i, (w, b) in enumerate(params):
        h = jnp.dot(h.astype(jnp.bfloat16), w.astype(jnp.bfloat16),
                    preferred_element_type=jnp.float32) + b
        if i < len(params) - 1:
            h = jnp.maximum(h, 0.0)
    return h


if __name__ == "__main__":
    # DenseNetwork(state_space=4, action_space=2, layers=[32, 32], policy=False)
    state_space = 4
    action_space = 2
    layers = [32, 32]
    batch = 2

    root = jax.random.PRNGKey(0)
    k_params, k_x = jax.random.split(root)
    params = build_dense_network_params(k_params, state_space, action_space, layers)

    # One-time padding / bf16 cast (outside any rollout loop).
    padded_params = pad_dense_network_params(params)

    x = jax.random.normal(k_x, (batch, state_space), jnp.float32)
    out = jax.block_until_ready(dense_network_forward(x, padded_params, action_space))
    assert out.shape == (batch, action_space)
    assert jnp.allclose(out, ref_forward_bf16(x, params), atol=1e-4, rtol=1e-4)
    assert jnp.allclose(out, ref_forward_f32(x, params), atol=5e-2, rtol=5e-2)

    # Large rollout-style batch: exercises the multi-step grid / megacore path.
    big_batch = 512
    xb = jax.random.normal(jax.random.PRNGKey(1), (big_batch, state_space), jnp.float32)
    out_b = jax.block_until_ready(dense_network_forward(xb, padded_params, action_space))
    assert out_b.shape == (big_batch, action_space)
    assert jnp.allclose(out_b, ref_forward_bf16(xb, params), atol=1e-4, rtol=1e-4)
    assert jnp.allclose(out_b, ref_forward_f32(xb, params), atol=5e-2, rtol=5e-2)

    print("KERNEL_OK")
</pallas_src>

<mosaic_0001>
module attributes {stable_mosaic.version = 11 : i64} {
  func.func @kernel(%arg0: i32, %arg1: memref<8x4xf32, #tpu.memory_space<vmem>>, %arg2: memref<4x128xbf16, #tpu.memory_space<vmem>>, %arg3: memref<1x128xf32, #tpu.memory_space<vmem>>, %arg4: memref<128x128xbf16, #tpu.memory_space<vmem>>, %arg5: memref<1x128xf32, #tpu.memory_space<vmem>>, %arg6: memref<128x128xbf16, #tpu.memory_space<vmem>>, %arg7: memref<1x128xf32, #tpu.memory_space<vmem>>, %arg8: memref<8x128xf32, #tpu.memory_space<vmem>>) attributes {dimension_semantics = [#tpu.dimension_semantics<parallel>], iteration_bounds = array<i64: 1>, scalar_prefetch = 0 : i64, scratch_operands = 0 : i64, tpu.core_type = #tpu.core_type<tc>, window_params = [{transform_indices = @transform_0, window_bounds = array<i64: 8, 4>}, {pipeline_mode = #tpu.pipeline_mode<synchronous>, transform_indices = @transform_1, window_bounds = array<i64: 4, 128>}, {pipeline_mode = #tpu.pipeline_mode<synchronous>, transform_indices = @transform_2, window_bounds = array<i64: 1, 128>}, {pipeline_mode = #tpu.pipeline_mode<synchronous>, transform_indices = @transform_3, window_bounds = array<i64: 128, 128>}, {pipeline_mode = #tpu.pipeline_mode<synchronous>, transform_indices = @transform_4, window_bounds = array<i64: 1, 128>}, {pipeline_mode = #tpu.pipeline_mode<synchronous>, transform_indices = @transform_5, window_bounds = array<i64: 128, 128>}, {pipeline_mode = #tpu.pipeline_mode<synchronous>, transform_indices = @transform_6, window_bounds = array<i64: 1, 128>}, {transform_indices = @transform_7, window_bounds = array<i64: 8, 128>}]} {
    %c0 = arith.constant 0 : index
    %c0_0 = arith.constant 0 : index
    %0 = vector.load %arg1[%c0, %c0_0] : memref<8x4xf32, #tpu.memory_space<vmem>>, vector<8x4xf32>
    %1 = arith.truncf %0 : vector<8x4xf32> to vector<8x4xbf16>
    %c0_1 = arith.constant 0 : index
    %c0_2 = arith.constant 0 : index
    %2 = vector.load %arg2[%c0_1, %c0_2] : memref<4x128xbf16, #tpu.memory_space<vmem>>, vector<4x128xbf16>
    %c0_3 = arith.constant 0 : index
    %c0_4 = arith.constant 0 : index
    %3 = vector.load %arg3[%c0_3, %c0_4] : memref<1x128xf32, #tpu.memory_space<vmem>>, vector<1x128xf32>
    %cst = arith.constant dense<0.000000e+00> : vector<8x128xf32>
    %4 = tpu.matmul %1, %2, %cst {dimension_numbers = #tpu.dot_dimension_numbers<[1], [0], [0], [1], [0, 0, 1, 1], [], []>} : vector<8x4xbf16>, vector<4x128xbf16>, vector<8x128xf32> -> vector<8x128xf32>
    %5 = vector.broadcast %3 : vector<1x128xf32> to vector<8x128xf32>
    %6 = arith.addf %4, %5 : vector<8x128xf32>
    %cst_5 = arith.constant 0.000000e+00 : f32
    %7 = vector.broadcast %cst_5 : f32 to vector<8x128xf32>
    %8 = arith.maximumf %6, %7 : vector<8x128xf32>
    %9 = arith.truncf %8 : vector<8x128xf32> to vector<8x128xbf16>
    %c0_6 = arith.constant 0 : index
    %c0_7 = arith.constant 0 : index
    %10 = vector.load %arg4[%c0_6, %c0_7] : memref<128x128xbf16, #tpu.memory_space<vmem>>, vector<128x128xbf16>
    %c0_8 = arith.constant 0 : index
    %c0_9 = arith.constant 0 : index
    %11 = vector.load %arg5[%c0_8, %c0_9] : memref<1x128xf32, #tpu.memory_space<vmem>>, vector<1x128xf32>
    %cst_10 = arith.constant dense<0.000000e+00> : vector<8x128xf32>
    %12 = tpu.matmul %9, %10, %cst_10 {dimension_numbers = #tpu.dot_dimension_numbers<[1], [0], [0], [1], [0, 0, 1, 1], [], []>} : vector<8x128xbf16>, vector<128x128xbf16>, vector<8x128xf32> -> vector<8x128xf32>
    %13 = vector.broadcast %11 : vector<1x128xf32> to vector<8x128xf32>
    %14 = arith.addf %12, %13 : vector<8x128xf32>
    %cst_11 = arith.constant 0.000000e+00 : f32
    %15 = vector.broadcast %cst_11 : f32 to vector<8x128xf32>
    %16 = arith.maximumf %14, %15 : vector<8x128xf32>
    %17 = arith.truncf %16 : vector<8x128xf32> to vector<8x128xbf16>
    %c0_12 = arith.constant 0 : index
    %c0_13 = arith.constant 0 : index
    %18 = vector.load %arg6[%c0_12, %c0_13] : memref<128x128xbf16, #tpu.memory_space<vmem>>, vector<128x128xbf16>
    %c0_14 = arith.constant 0 : index
    %c0_15 = arith.constant 0 : index
    %19 = vector.load %arg7[%c0_14, %c0_15] : memref<1x128xf32, #tpu.memory_space<vmem>>, vector<1x128xf32>
    %cst_16 = arith.constant dense<0.000000e+00> : vector<8x128xf32>
    %20 = tpu.matmul %17, %18, %cst_16 {dimension_numbers = #tpu.dot_dimension_numbers<[1], [0], [0], [1], [0, 0, 1, 1], [], []>} : vector<8x128xbf16>, vector<128x128xbf16>, vector<8x128xf32> -> vector<8x128xf32>
    %21 = vector.broadcast %19 : vector<1x128xf32> to vector<8x128xf32>
    %22 = arith.addf %20, %21 : vector<8x128xf32>
    %c0_17 = arith.constant 0 : index
    %c0_18 = arith.constant 0 : index
    %23 = vector.load %arg8[%c0_17, %c0_18] : memref<8x128xf32, #tpu.memory_space<vmem>>, vector<8x128xf32>
    tpu.vector_store %arg8[%c0_17, %c0_18], %22 {strides = array<i32>} : memref<8x128xf32, #tpu.memory_space<vmem>>, vector<8x128xf32>,
    return
  }
  func.func @transform_0(%arg0: i32) -> (i32, i32) {
    %c0_i32 = arith.constant 0 : i32
    %c0_i32_0 = arith.constant 0 : i32
    return %arg0, %c0_i32 : i32, i32
  }
  func.func @transform_1(%arg0: i32) -> (i32, i32) {
    %c0_i32 = arith.constant 0 : i32
    %c0_i32_0 = arith.constant 0 : i32
    %c0_i32_1 = arith.constant 0 : i32
    return %c0_i32, %c0_i32_0 : i32, i32
  }
  func.func @transform_2(%arg0: i32) -> (i32, i32) {
    %c0_i32 = arith.constant 0 : i32
    %c0_i32_0 = arith.constant 0 : i32
    %c0_i32_1 = arith.constant 0 : i32
    return %c0_i32, %c0_i32_0 : i32, i32
  }
  func.func @transform_3(%arg0: i32) -> (i32, i32) {
    %c0_i32 = arith.constant 0 : i32
    %c0_i32_0 = arith.constant 0 : i32
    %c0_i32_1 = arith.constant 0 : i32
    return %c0_i32, %c0_i32_0 : i32, i32
  }
  func.func @transform_4(%arg0: i32) -> (i32, i32) {
    %c0_i32 = arith.constant 0 : i32
    %c0_i32_0 = arith.constant 0 : i32
    %c0_i32_1 = arith.constant 0 : i32
    return %c0_i32, %c0_i32_0 : i32, i32
  }
  func.func @transform_5(%arg0: i32) -> (i32, i32) {
    %c0_i32 = arith.constant 0 : i32
    %c0_i32_0 = arith.constant 0 : i32
    %c0_i32_1 = arith.constant 0 : i32
    return %c0_i32, %c0_i32_0 : i32, i32
  }
  func.func @transform_6(%arg0: i32) -> (i32, i32) {
    %c0_i32 = arith.constant 0 : i32
    %c0_i32_0 = arith.constant 0 : i32
    %c0_i32_1 = arith.constant 0 : i32
    return %c0_i32, %c0_i32_0 : i32, i32
  }
  func.func @transform_7(%arg0: i32) -> (i32, i32) {
    %c0_i32 = arith.constant 0 : i32
    %c0_i32_0 = arith.constant 0 : i32
    return %arg0, %c0_i32 : i32, i32
  }
}

</mosaic_0001>

<llo_original>
// kernel: _forward_padded.1
$region0: #{_forward_padded.1}
  #allocation0 [shape = 'u32[]', space=smem, size = 0x4, offset = 0x4, fixed_abs, tag = 'smem constant byte address 0x4 - core index']
  #allocation1 [shape = 'u32[72,128]{1,0:T(1,128)}', space=vmem, size = 0x9000, scoped, tag = 'internal scratch']
  %s0 = inlined_call_operand.vmem [shape: f32[8,4], index: 0, kind: input, shape index: {}]
  %s1 = inlined_call_operand.vmem [shape: bf16[4,128], index: 1, kind: input, shape index: {}]
  %s2 = inlined_call_operand.vmem [shape: f32[1,128], index: 2, kind: input, shape index: {}]
  %s3 = inlined_call_operand.hbm [shape: bf16[128,128], index: 3, kind: input, shape index: {}]
  %s4 = inlined_call_operand.vmem [shape: f32[1,128], index: 4, kind: input, shape index: {}]
  %s5 = inlined_call_operand.hbm [shape: bf16[128,128], index: 5, kind: input, shape index: {}]
  %s6 = inlined_call_operand.vmem [shape: f32[1,128], index: 6, kind: input, shape index: {}]
  %s7 = inlined_call_operand.vmem [shape: f32[8,128], index: 7, kind: output, shape index: {}]
  %s8 = sld [smem:[#allocation0]]
  $region46: #{_forward_padded.1} parent=0
    _
  %s10 = ssub.s32 1, %s8
  %s11 = scalar_select 0, %s10, %s8
  $region1: #{_forward_padded.1} parent=0
    #allocation2 [shape = 'u8[32768]{0}', space=vmem, size = 0x8000, scoped, tag = 'input window, operand 3, single buffered']
    #allocation3 [shape = 's32[1]{0}', space=sflag, size = 0x4, scoped, tag = 'scoped memory for _forward_padded.1']
    #allocation4 [shape = 'u8[32768]{0}', space=vmem, size = 0x8000, scoped, tag = 'input window, operand 5, single buffered']
    #allocation5 [shape = 's32[1]{0}', space=sflag, size = 0x4, scoped, tag = 'scoped memory for _forward_padded.1']
    %12 = vsyncpa [#allocation3], 0
    %13 = vsyncpa [#allocation5], 0
    // Predicated region
    $region2: #{_forward_padded.1} parent=1 // pred_check
      _
    $region3: #{_forward_padded.1} parent=1 // pred_check_branch
      %15 = sbr.rel (0) target = $region5
    $region4: #{_forward_padded.1} parent=1 // pred_region
      _
    $region5: #{_forward_padded.1} parent=1 // pred_fallthru
      _
    // Predicated region
    $region6: #{_forward_padded.1} parent=1 // pred_check
      _
    $region7: #{_forward_padded.1} parent=1 // pred_check_branch
      %17 = sbr.rel (0) target = $region9
    $region8: #{_forward_padded.1} parent=1 // pred_region
      _
    $region9: #{_forward_padded.1} parent=1 // pred_fallthru
      _
    // Predicated region
    $region10: #{_forward_padded.1} parent=1 // pred_check
      _
    $region11: #{_forward_padded.1} parent=1 // pred_check_branch
      %19 = sbr.rel (0) target = $region13
    $region12: #{_forward_padded.1} parent=1 // pred_region
      _
    $region13: #{_forward_padded.1} parent=1 // pred_fallthru
      _
    // Predicated region
    $region14: #{_forward_padded.1} parent=1 // pred_check
      _
    $region15: #{_forward_padded.1} parent=1 // pred_check_branch
      %21 = sbr.rel (0) target = $region17
    $region16: #{_forward_padded.1} parent=1 // pred_region
      %23 = vsyncadd [#allocation3], 0
      %s24 = sshll.u32 %s3, 4
      %s25 = int_to_ptr.hbm [resolvable:$true] %s24
      %s26 = sshll.u32 [#allocation2], 4
      %s27 = int_to_ptr.vmem [resolvable:$true] %s26
      %32 = dma.hbm_to_vmem [thread:$0]  %s25, 1024, %s27, [#allocation3], 64, 64, 4
    $region17: #{_forward_padded.1} parent=1 // pred_fallthru
      _
    // Predicated region
    $region18: #{_forward_padded.1} parent=1 // pred_check
      _
    $region19: #{_forward_padded.1} parent=1 // pred_check_branch
      %34 = sbr.rel (0) target = $region21
    $region20: #{_forward_padded.1} parent=1 // pred_region
      _
    $region21: #{_forward_padded.1} parent=1 // pred_fallthru
      _
    // Predicated region
    $region22: #{_forward_padded.1} parent=1 // pred_check
      _
    $region23: #{_forward_padded.1} parent=1 // pred_check_branch
      %36 = sbr.rel (0) target = $region25
    $region24: #{_forward_padded.1} parent=1 // pred_region
      %38 = vsyncadd [#allocation5], 0
      %s39 = sshll.u32 %s5, 4
      %s40 = int_to_ptr.hbm [resolvable:$true] %s39
      %s41 = sshll.u32 [#allocation4], 4
      %s42 = int_to_ptr.vmem [resolvable:$true] %s41
      %47 = dma.hbm_to_vmem [thread:$0]  %s40, 1024, %s42, [#allocation5], 64, 64, 4
    $region25: #{_forward_padded.1} parent=1 // pred_fallthru
      _
    // Predicated region
    $region26: #{_forward_padded.1} parent=1 // pred_check
      _
    $region27: #{_forward_padded.1} parent=1 // pred_check_branch
      %49 = sbr.rel (0) target = $region29
    $region28: #{_forward_padded.1} parent=1 // pred_region
      _
    $region29: #{_forward_padded.1} parent=1 // pred_fallthru
      _
    // Predicated region
    $region30: #{_forward_padded.1} parent=1 // pred_check
      _
    $region31: #{_forward_padded.1} parent=1 // pred_check_branch
      %51 = sbr.rel (0) target = $region33
    $region32: #{_forward_padded.1} parent=1 // pred_region
      %53 = dma.done [#allocation3], 1024
    $region33: #{_forward_padded.1} parent=1 // pred_fallthru
      _
    // Predicated region
    $region34: #{_forward_padded.1} parent=1 // pred_check
      _
    $region35: #{_forward_padded.1} parent=1 // pred_check_branch
      %55 = sbr.rel (0) target = $region37
    $region36: #{_forward_padded.1} parent=1 // pred_region
      %57 = dma.done [#allocation5], 1024
    $region37: #{_forward_padded.1} parent=1 // pred_fallthru
      _
    %v59 = vld [vmem:[%s0] sm:$0xff]
    %v60 = vpack.c.bf16 %v59, %v59
    %v61 = vld [vmem:[%s1] sm:$0x3]
    %v62 = vld [vmem:[%s2] sm:$0x1]
    %v64 = vperm.slane %v62, 0
    %vm66 = vcmask 31744
    %v68 = vsel %vm66, %v60, 0
    %vm70 = vcmask 1041408
    %v72 = vsel %vm70, %v61, 0
    %74 = vmatpush.bf16.msra.mxu0 0
    %75 = vmatpush.bf16.msra.mxu0 0
    %76 = vmatpush.bf16.msra.mxu0 0
    %77 = vmatpush.bf16.msra.mxu0 0
    %78 = vmatpush.bf16.msra.mxu0 0
    %79 = vmatpush.bf16.msra.mxu0 0
    %80 = vmatpush.bf16.msra.mxu0 0
    %81 = vmatpush.bf16.msra.mxu0 %v72
    %82 = vmatmul.bf16.gmra.mxu0 %v68
    %v83 = vpop.f32.mrf.mxu0
    %v84 = vadd.f32 %v64, %v83
    %v85 = vpop.f32.mrf.mxu0
    %86 = vdwg.mxu0
    %v87 = vmax.f32 %v84, 0.0
    %v88 = vpack.c.bf16 %v87, %v87
    %v89 = vld [vmem:[#allocation2] sm:$0xf]
    %v90 = vld [vmem:[#allocation2 + $0x4] sm:$0xf]
    %v91 = vld [vmem:[#allocation2 + $0x8] sm:$0xf]
    %v92 = vld [vmem:[#allocation2 + $0xc] sm:$0xf]
    %v93 = vld [vmem:[#allocation2 + $0x10] sm:$0xf]
    %v94 = vld [vmem:[#allocation2 + $0x14] sm:$0xf]
    %v95 = vld [vmem:[#allocation2 + $0x18] sm:$0xf]
    %v96 = vld [vmem:[#allocation2 + $0x1c] sm:$0xf]
    %v97 = vld [vmem:[#allocation2 + $0x20] sm:$0xf]
    %v98 = vld [vmem:[#allocation2 + $0x24] sm:$0xf]
    %v99 = vld [vmem:[#allocation2 + $0x28] sm:$0xf]
    %v100 = vld [vmem:[#allocation2 + $0x2c] sm:$0xf]
    %v101 = vld [vmem:[#allocation2 + $0x30] sm:$0xf]
    %v102 = vld [vmem:[#allocation2 + $0x34] sm:$0xf]
    %v103 = vld [vmem:[#allocation2 + $0x38] sm:$0xf]
    %v104 = vld [vmem:[#allocation2 + $0x3c] sm:$0xf]
    %v105 = vld [vmem:[%s4] sm:$0x1]
    %v107 = vperm.slane %v105, 0
    %v125 = vunpack.c.l.b16 %v89
    %v126 = vunpack.c.l.b16 %v90
    %v127 = vunpack.c.l.b16 %v91
    %v128 = vunpack.c.l.b16 %v92
    %v129 = vunpack.c.l.b16 %v93
    %v130 = vunpack.c.l.b16 %v94
    %v131 = vunpack.c.l.b16 %v95
    %v132 = vunpack.c.l.b16 %v96
    %v133 = vunpack.c.l.b16 %v97
    %v134 = vunpack.c.l.b16 %v98
    %v135 = vunpack.c.l.b16 %v99
    %v136 = vunpack.c.l.b16 %v100
    %v137 = vunpack.c.l.b16 %v101
    %v138 = vunpack.c.l.b16 %v102
    %v139 = vunpack.c.l.b16 %v103
    %v140 = vunpack.c.l.b16 %v104
    %v141 = vpack.c.b16 %v126, %v125
    %v142 = vpack.c.b16 %v128, %v127
    %v143 = vpack.c.b16 %v130, %v129
    %v144 = vpack.c.b16 %v132, %v131
    %v145 = vpack.c.b16 %v134, %v133
    %v146 = vpack.c.b16 %v136, %v135
    %v147 = vpack.c.b16 %v138, %v137
    %v148 = vpack.c.b16 %v140, %v139
    %157 = vmatpush.bf16.msra.mxu0 %v148
    %158 = vmatpush.bf16.msra.mxu0 %v147
    %159 = vmatpush.bf16.msra.mxu0 %v146
    %160 = vmatpush.bf16.msra.mxu0 %v145
    %161 = vmatpush.bf16.msra.mxu0 %v144
    %162 = vmatpush.bf16.msra.mxu0 %v143
    %163 = vmatpush.bf16.msra.mxu0 %v142
    %164 = vmatpush.bf16.msra.mxu0 %v141
    %165 = vmatmul.bf16.gmra.mxu0 %v88
    %v166 = vpop.f32.mrf.mxu0
    %v167 = vadd.f32 %v107, %v166
    %v168 = vpop.f32.mrf.mxu0
    %169 = vdwg.mxu0
    %v170 = vmax.f32 %v167, 0.0
    %v171 = vpack.c.bf16 %v170, %v170
    %v172 = vld [vmem:[#allocation4] sm:$0xf]
    %v173 = vld [vmem:[#allocation4 + $0x4] sm:$0xf]
    %v174 = vld [vmem:[#allocation4 + $0x8] sm:$0xf]
    %v175 = vld [vmem:[#allocation4 + $0xc] sm:$0xf]
    %v176 = vld [vmem:[#allocation4 + $0x10] sm:$0xf]
    %v177 = vld [vmem:[#allocation4 + $0x14] sm:$0xf]
    %v178 = vld [vmem:[#allocation4 + $0x18] sm:$0xf]
    %v179 = vld [vmem:[#allocation4 + $0x1c] sm:$0xf]
    %v180 = vld [vmem:[#allocation4 + $0x20] sm:$0xf]
    %v181 = vld [vmem:[#allocation4 + $0x24] sm:$0xf]
    %v182 = vld [vmem:[#allocation4 + $0x28] sm:$0xf]
    %v183 = vld [vmem:[#allocation4 + $0x2c] sm:$0xf]
    %v184 = vld [vmem:[#allocation4 + $0x30] sm:$0xf]
    %v185 = vld [vmem:[#allocation4 + $0x34] sm:$0xf]
    %v186 = vld [vmem:[#allocation4 + $0x38] sm:$0xf]
    %v187 = vld [vmem:[#allocation4 + $0x3c] sm:$0xf]
    %v188 = vld [vmem:[%s6] sm:$0x1]
    %v190 = vperm.slane %v188, 0
    %v208 = vunpack.c.l.b16 %v172
    %v209 = vunpack.c.l.b16 %v173
    %v210 = vunpack.c.l.b16 %v174
    %v211 = vunpack.c.l.b16 %v175
    %v212 = vunpack.c.l.b16 %v176
    %v213 = vunpack.c.l.b16 %v177
    %v214 = vunpack.c.l.b16 %v178
    %v215 = vunpack.c.l.b16 %v179
    %v216 = vunpack.c.l.b16 %v180
    %v217 = vunpack.c.l.b16 %v181
    %v218 = vunpack.c.l.b16 %v182
    %v219 = vunpack.c.l.b16 %v183
    %v220 = vunpack.c.l.b16 %v184
    %v221 = vunpack.c.l.b16 %v185
    %v222 = vunpack.c.l.b16 %v186
    %v223 = vunpack.c.l.b16 %v187
    %v224 = vpack.c.b16 %v209, %v208
    %v225 = vpack.c.b16 %v211, %v210
    %v226 = vpack.c.b16 %v213, %v212
    %v227 = vpack.c.b16 %v215, %v214
    %v228 = vpack.c.b16 %v217, %v216
    %v229 = vpack.c.b16 %v219, %v218
    %v230 = vpack.c.b16 %v221, %v220
    %v231 = vpack.c.b16 %v223, %v222
    %240 = vmatpush.bf16.msra.mxu0 %v231
    %241 = vmatpush.bf16.msra.mxu0 %v230
    %242 = vmatpush.bf16.msra.mxu0 %v229
    %243 = vmatpush.bf16.msra.mxu0 %v228
    %244 = vmatpush.bf16.msra.mxu0 %v227
    %245 = vmatpush.bf16.msra.mxu0 %v226
    %246 = vmatpush.bf16.msra.mxu0 %v225
    %247 = vmatpush.bf16.msra.mxu0 %v224
    %248 = vmatmul.bf16.gmra.mxu0 %v171
    %v249 = vpop.f32.mrf.mxu0
    %v250 = vadd.f32 %v190, %v249
    %v251 = vpop.f32.mrf.mxu0
    %252 = vdwg.mxu0
    %253 = vst [vmem:[%s7] sm:$0xff] %v250
    // Predicated region
    $region38: #{_forward_padded.1} parent=1 // pred_check
      _
    $region39: #{_forward_padded.1} parent=1 // pred_check_branch
      %255 = sbr.rel (0) target = $region41
    $region40: #{_forward_padded.1} parent=1 // pred_region
      _
    $region41: #{_forward_padded.1} parent=1 // pred_fallthru
      _
    // Predicated region
    $region42: #{_forward_padded.1} parent=1 // pred_check
      _
    $region43: #{_forward_padded.1} parent=1 // pred_check_branch
      %257 = sbr.rel (0) target = $region45
    $region44: #{_forward_padded.1} parent=1 // pred_region
      _
    $region45: #{_forward_padded.1} parent=1 // pred_fallthru
      _
    %258 = vsyncpa [#allocation3], 1
    %259 = vsyncpa [#allocation5], 1

</llo_original>
